<compile_context>
chip_gen: v7x
topology: tpu7x:2x2x1
jax: 0.10.0
libtpu: 0.0.40
codegen_flags: <defaults>
</compile_context>

<pallas_src>
import math
import functools

import numpy as np
import jax
import jax.numpy as jnp
from jax.experimental import pallas as pl
from jax.experimental.pallas import tpu as pltpu


def _round_up(x, m):
    return ((x + m - 1) // m) * m


# ----------------------------------------------------------------------------
# Row-tiled linear kernel: y = x @ W^T + b  on 2D [rows, K] inputs.
# ----------------------------------------------------------------------------
def _linear_kernel(x_ref, w_ref, b_ref, o_ref):
    o_ref[...] = (jnp.dot(x_ref[...], w_ref[...],
                          preferred_element_type=jnp.float32) + b_ref[...])


def linear_pallas(x2d, w_t, b, *, tm=256):
    """x2d: [M, K] f32, w_t: [K, Nout] f32, b: [Nout] f32 -> [M, Nout] f32."""
    M, K = x2d.shape
    Nout = w_t.shape[1]
    tm_eff = min(tm, _round_up(M, 8))
    Mp = _round_up(M, tm_eff)
    if Mp != M:
        x2d = jnp.pad(x2d, ((0, Mp - M), (0, 0)))
    out = pl.pallas_call(
        _linear_kernel,
        out_shape=jax.ShapeDtypeStruct((Mp, Nout), jnp.float32),
        grid=(Mp // tm_eff,),
        in_specs=[
            pl.BlockSpec((tm_eff, K), lambda i: (i, 0)),
            pl.BlockSpec((K, Nout), lambda i: (0, 0)),
            pl.BlockSpec((1, Nout), lambda i: (0, 0)),
        ],
        out_specs=pl.BlockSpec((tm_eff, Nout), lambda i: (i, 0)),
        compiler_params=pltpu.CompilerParams(dimension_semantics=("parallel",)),
    )(x2d, w_t, b.reshape(1, Nout))
    return out[:M] if Mp != M else out


# ----------------------------------------------------------------------------
# MSDA3D sampling kernel.
#   prior_ref: [1, Cp, tn]       (px, py, mid, [pw, ph]) -- query axis in lanes
#   samp_ref : [1, 4H, P, tn]    (ox | oy | oz | attn-logits), head-blocked
#   val_ref  : [1, H, Dh, S]     value features, map-pixel axis in lanes
#   out_ref  : [1, H, Dh, tn]    per-head attention features, query axis in lanes
# ----------------------------------------------------------------------------
def _msda_kernel(prior_ref, samp_ref, val_ref, out_ref, *,
                 levels, num_heads, rad_pts, lvl_pts, prior4):
    H = num_heads
    P = samp_ref.shape[2]
    Nt = samp_ref.shape[3]
    Dh = val_ref.shape[2]
    L = len(levels)

    sp = samp_ref[0]                                   # [4H, P, Nt]
    ox = sp[0:H]
    oy = sp[H:2 * H]
    oz = sp[2 * H:3 * H]
    logits = sp[3 * H:4 * H]                           # [H, P, Nt]

    pr = prior_ref[0]                                  # [Cp, Nt]
    px = pr[None, 0:1, :]                              # [1, 1, Nt]
    py = pr[None, 1:2, :]
    mid_f = pr[None, 2:3, :]
    mid_i = mid_f.astype(jnp.int32)

    # softmax over the point axis (per head & query); reciprocal on the EUP slot.
    m = jnp.max(logits, axis=1, keepdims=True)
    e = jnp.exp(logits - m)
    attn = e * pl.reciprocal(jnp.sum(e, axis=1, keepdims=True), approx=True)

    # sample x/y locations (normalized coordinates).
    if prior4:
        pw = pr[None, 3:4, :]
        ph = pr[None, 4:5, :]
        sx = px + ox * (pw * (0.5 / float(rad_pts)))
        sy = py + oy * (ph * (0.5 / float(rad_pts)))
    else:
        # per-query reciprocal normalizers (W, H) of the map each query lives on;
        # 1/W, 1/H are compile-time constants per level.
        rw = jnp.ones_like(px)
        rh = jnp.ones_like(py)
        for l, (Hl, Wl, _) in enumerate(levels):
            sel = mid_i == l
            rw = jnp.where(sel, 1.0 / float(Wl), rw)
            rh = jnp.where(sel, 1.0 / float(Hl), rh)
        sx = px + ox * rw
        sy = py + oy * rh

    # z / level coordinate (linear interpolation across maps).
    if lvl_pts > 1:
        lvl_f = (jax.lax.broadcasted_iota(jnp.int32, (H, P, Nt), 1)
                 % lvl_pts).astype(jnp.float32)
        z_base = mid_f + lvl_f - 0.5 * (lvl_pts - 1)
    else:
        z_base = mid_f
    z_div = float(max(L - 1, 1))        # guard L == 1 (divide-by-zero in the original)
    z_cont = ((z_base + jnp.tanh(oz)) / z_div) * float(L - 1)
    z0 = jnp.floor(z_cont)
    tz = z_cont - z0
    z0i = z0.astype(jnp.int32)

    acc = jnp.zeros((H, Dh, Nt), jnp.float32)

    for l, (Hl, Wl, base) in enumerate(levels):
        S_l = Hl * Wl

        # linear interpolation weight along the map/z axis for this level
        w_lvl = (jnp.where(z0i == l, 1.0 - tz, 0.0) +
                 jnp.where(z0i == l - 1, tz, 0.0))

        # bilinear sampling inside map l (align_corners=False, zero padding)
        ix = sx * float(Wl) - 0.5
        iy = sy * float(Hl) - 0.5
        x0 = jnp.floor(ix)
        y0 = jnp.floor(iy)
        tx = ix - x0
        ty = iy - y0
        x0i = x0.astype(jnp.int32)
        y0i = y0.astype(jnp.int32)

        iota_sl = jax.lax.broadcasted_iota(jnp.int32, (1, S_l, Nt), 1)
        wmat = jnp.zeros((H, S_l, Nt), jnp.float32)    # gather weights for this level

        for dy in (0, 1):
            wy = ty if dy else 1.0 - ty
            yi = y0i + dy
            for dx in (0, 1):
                wx = tx if dx else 1.0 - tx
                xi = x0i + dx
                valid = (xi >= 0) & (xi < Wl) & (yi >= 0) & (yi < Hl)
                w_tot = jnp.where(valid, attn * w_lvl * wy * wx, 0.0)    # [H, P, Nt]
                idx = (jnp.clip(yi, 0, Hl - 1) * Wl +
                       jnp.clip(xi, 0, Wl - 1))                          # [H, P, Nt]
                for p in range(P):
                    eq = idx[:, p, None, :] == iota_sl                   # [H, S_l, Nt]
                    wmat = wmat + jnp.where(eq, w_tot[:, p, None, :], 0.0)

        # batched MXU dot against this level's value slice, accumulated in f32.
        # TODO(synk): for very large S (v7x 64 MiB VMEM) keep val in pl.ANY and DMA
        # per-level slices manually instead of a fully resident val block.
        val_l = val_ref[0, :, :, base:base + S_l]                        # [H, Dh, S_l]
        acc = acc + jnp.einsum('hds,hsn->hdn', val_l, wmat,
                               preferred_element_type=jnp.float32)

    out_ref[0] = acc


def msda_sample_pallas(prior, samp, val_t, *, levels, num_heads, rad_pts,
                       lvl_pts, prior4, tn):
    B = samp.shape[0]
    P = samp.shape[2]
    Np = samp.shape[3]
    H = num_heads
    Dh = val_t.shape[2]
    S = val_t.shape[3]
    Cp = prior.shape[1]
    n_tiles = Np // tn

    kernel = functools.partial(_msda_kernel, levels=levels, num_heads=H,
                               rad_pts=rad_pts, lvl_pts=lvl_pts, prior4=prior4)

    return pl.pallas_call(
        kernel,
        out_shape=jax.ShapeDtypeStruct((B, H, Dh, Np), jnp.float32),
        grid=(B, n_tiles),
        in_specs=[
            pl.BlockSpec((1, Cp, tn), lambda b, n: (b, 0, n)),
            pl.BlockSpec((1, 4 * H, P, tn), lambda b, n: (b, 0, 0, n)),
            # value features stay resident across the query-tile axis
            pl.BlockSpec((1, H, Dh, S), lambda b, n: (b, 0, 0, 0)),
        ],
        out_specs=pl.BlockSpec((1, H, Dh, tn), lambda b, n: (b, 0, 0, n)),
        compiler_params=pltpu.CompilerParams(
            dimension_semantics=("parallel", "parallel")),
    )(prior, samp, val_t)


# ----------------------------------------------------------------------------
# Full MSDA3D forward (Pallas path). Layout plumbing (reshape/transpose) in JAX.
# ----------------------------------------------------------------------------
def msda3d_forward_pallas(params, in_feats, sample_priors, sample_feats,
                          map_hw, map_offs, map_ids, *,
                          num_heads, rad_pts, lvl_pts):
    B, N, in_size = in_feats.shape
    S = sample_feats.shape[1]
    H = num_heads
    P = rad_pts * lvl_pts

    # Static feature-pyramid geometry (compile-time constants for the kernel).
    hw_np = np.asarray(jax.device_get(map_hw)).astype(np.int64)
    offs_np = np.asarray(jax.device_get(map_offs)).astype(np.int64)
    levels = tuple((int(h), int(w), int(o))
                   for (h, w), o in zip(hw_np, offs_np))

    # Fused sample-offset + attention-logit projection (in_feats read once).
    w_oa = jnp.concatenate([params["w_off"], params["w_att"]], axis=0).T
    b_oa = jnp.concatenate([params["b_off"], params["b_att"]], axis=0)
    oa = linear_pallas(in_feats.reshape(B * N, in_size), w_oa, b_oa)
    oa = oa.reshape(B, N, H * P * 4)
    offs = oa[..., :H * P * 3].reshape(B, N, H, P, 3)
    attn_logits = oa[..., H * P * 3:].reshape(B, N, H, P)

    # Value projection.
    val = linear_pallas(sample_feats.reshape(B * S, -1),
                        params["w_val"].T, params["b_val"])
    V = val.shape[-1]
    Dh = V // H
    val_t = jnp.transpose(val.reshape(B, S, H, Dh), (0, 2, 3, 1))     # [B, H, Dh, S]

    # Per-query tensors, channels packed, queries (N) in the lane dimension.
    ox = jnp.transpose(offs[..., 0], (0, 2, 3, 1))                    # [B, H, P, N]
    oy = jnp.transpose(offs[..., 1], (0, 2, 3, 1))
    oz = jnp.transpose(offs[..., 2], (0, 2, 3, 1))
    at = jnp.transpose(attn_logits, (0, 2, 3, 1))
    samp = jnp.concatenate([ox, oy, oz, at], axis=1)                  # [B, 4H, P, N]

    prior4 = sample_priors.shape[-1] == 4
    pri_ch = [sample_priors[..., 0], sample_priors[..., 1],
              map_ids.astype(jnp.float32)]
    if prior4:
        pri_ch += [sample_priors[..., 2], sample_priors[..., 3]]
    prior = jnp.stack(pri_ch, axis=1).astype(jnp.float32)             # [B, Cp, N]

    # Query tiling (lane-dense last dim).
    tn = min(128, N)
    Np = _round_up(N, tn)
    if Np != N:
        samp = jnp.pad(samp, ((0, 0), (0, 0), (0, 0), (0, Np - N)))
        prior = jnp.pad(prior, ((0, 0), (0, 0), (0, Np - N)))

    out_t = msda_sample_pallas(prior, samp, val_t, levels=levels,
                               num_heads=H, rad_pts=rad_pts, lvl_pts=lvl_pts,
                               prior4=prior4, tn=tn)                  # [B, H, Dh, Np]

    attn_feats = jnp.transpose(out_t[..., :N], (0, 3, 1, 2)).reshape(B, N, V)
    out = linear_pallas(attn_feats.reshape(B * N, V),
                        params["w_out"].T, params["b_out"])
    return out.reshape(B, N, -1)


# ----------------------------------------------------------------------------
# Pure-JAX reference (same assumed MSDA3DF semantics) for verification.
# ----------------------------------------------------------------------------
def msda3d_forward_ref(params, in_feats, sample_priors, sample_feats,
                       map_hw, map_offs, map_ids,
                       *, num_heads, rad_pts, lvl_pts):
    B, N, _ = in_feats.shape
    H = num_heads
    P = rad_pts * lvl_pts
    L = map_hw.shape[0]

    val = sample_feats @ params["w_val"].T + params["b_val"]
    V = val.shape[-1]
    Dh = V // H
    S = val.shape[1]
    val = val.reshape(B, S, H, Dh)
    offs = (in_feats @ params["w_off"].T + params["b_off"]).reshape(B, N, H, P, 3)

    if sample_priors.shape[-1] == 2:
        norm = map_hw[:, ::-1][map_ids].astype(jnp.float32)           # [B, N, 2] (W, H)
        sample_xy = sample_priors[:, :, None, None, :2] + offs[..., :2] / norm[:, :, None, None, :]
    else:
        factors = 0.5 * sample_priors[:, :, None, None, 2:] / rad_pts
        sample_xy = sample_priors[:, :, None, None, :2] + offs[..., :2] * factors

    z = jnp.broadcast_to(map_ids[:, :, None, None, None].astype(jnp.float32),
                         (B, N, H, rad_pts, lvl_pts))
    z = z + jnp.arange(lvl_pts, dtype=jnp.float32) - 0.5 * (lvl_pts - 1)
    z = (z.reshape(B, N, H, P) + jnp.tanh(offs[..., 2])) / max(L - 1, 1)

    attn = jax.nn.softmax(
        (in_feats @ params["w_att"].T + params["b_att"]).reshape(B, N, H, P), axis=-1)

    sx = sample_xy[..., 0]
    sy = sample_xy[..., 1]
    z_cont = z * (L - 1)
    z0 = jnp.floor(z_cont)
    tz = z_cont - z0
    z0i = z0.astype(jnp.int32)

    b_idx = jnp.arange(B)[:, None, None, None]
    h_idx = jnp.arange(H)[None, None, :, None]
    acc = jnp.zeros((B, N, H, P, Dh), jnp.float32)

    for l in range(L):
        Hl = int(map_hw[l, 0])
        Wl = int(map_hw[l, 1])
        base = int(map_offs[l])
        w_lvl = jnp.where(z0i == l, 1.0 - tz, 0.0) + jnp.where(z0i + 1 == l, tz, 0.0)
        ix = sx * Wl - 0.5
        iy = sy * Hl - 0.5
        x0 = jnp.floor(ix)
        y0 = jnp.floor(iy)
        tx = ix - x0
        ty = iy - y0
        x0i = x0.astype(jnp.int32)
        y0i = y0.astype(jnp.int32)
        for dy in (0, 1):
            for dx in (0, 1):
                xi = x0i + dx
                yi = y0i + dy
                wxy = (ty if dy else (1.0 - ty)) * (tx if dx else (1.0 - tx))
                valid = ((xi >= 0) & (xi < Wl) & (yi >= 0) & (yi < Hl)).astype(jnp.float32)
                idx = base + jnp.clip(yi, 0, Hl - 1) * Wl + jnp.clip(xi, 0, Wl - 1)
                g = val[b_idx, idx, h_idx, :]                         # [B, N, H, P, Dh]
                w = attn * w_lvl * wxy * valid
                acc = acc + w[..., None] * g

    attn_feats = acc.sum(axis=3).reshape(B, N, V)
    return attn_feats @ params["w_out"].T + params["b_out"]


# ----------------------------------------------------------------------------
# Deterministic parameter init (mirrors MSDA3D.__init__).
# ----------------------------------------------------------------------------
def init_params(key, in_size, sample_size, val_size, out_size, num_heads, rad_pts, lvl_pts):
    H, R, Lp = num_heads, rad_pts, lvl_pts
    k1, k2 = jax.random.split(key, 2)

    # sample_offsets: zero weight, structured bias
    thetas = jnp.arange(H, dtype=jnp.float32) * (2.0 * math.pi / H)
    grid = jnp.stack([jnp.cos(thetas), jnp.sin(thetas), jnp.zeros_like(thetas)], axis=1)
    grid = grid / jnp.max(jnp.abs(grid), axis=1, keepdims=True)
    grid = jnp.tile(grid.reshape(H, 1, 1, 3), (1, R, Lp, 1))
    grid = grid * jnp.arange(1, R + 1, dtype=jnp.float32).reshape(1, R, 1, 1)
    b_off = grid.reshape(-1)
    w_off = jnp.zeros((H * R * Lp * 3, in_size), jnp.float32)

    # attn_weights: zero weight, zero bias
    w_att = jnp.zeros((H * R * Lp, in_size), jnp.float32)
    b_att = jnp.zeros((H * R * Lp,), jnp.float32)

    # val_proj / out_proj: xavier uniform weight, zero bias
    a_val = math.sqrt(6.0 / (sample_size + val_size))
    w_val = jax.random.uniform(k1, (val_size, sample_size), jnp.float32, -a_val, a_val)
    b_val = jnp.zeros((val_size,), jnp.float32)

    a_out = math.sqrt(6.0 / (val_size + out_size))
    w_out = jax.random.uniform(k2, (out_size, val_size), jnp.float32, -a_out, a_out)
    b_out = jnp.zeros((out_size,), jnp.float32)

    return dict(w_off=w_off, b_off=b_off, w_att=w_att, b_att=b_att,
                w_val=w_val, b_val=b_val, w_out=w_out, b_out=b_out)


if __name__ == "__main__":
    # module config
    in_size, sample_size = 32, 32
    num_heads, rad_pts, lvl_pts = 8, 4, 1
    val_size, out_size = in_size, in_size

    # problem sizes
    B, N = 2, 8
    map_hw = jnp.array([[8, 8], [4, 4], [2, 2]], jnp.int32)        # 3 feature maps
    map_offs = jnp.array([0, 64, 80], jnp.int32)
    S = 84                                                          # 64 + 16 + 4

    key = jax.random.PRNGKey(0)
    kp, k1, k2, k3, k4 = jax.random.split(key, 5)

    params = init_params(kp, in_size, sample_size, val_size, out_size,
                         num_heads, rad_pts, lvl_pts)

    in_feats = jax.random.normal(k1, (B, N, in_size), jnp.float32)
    sample_feats = jax.random.normal(k2, (B, S, sample_size), jnp.float32)
    sample_priors = jax.random.uniform(k3, (B, N, 2), jnp.float32)
    map_ids = jax.random.randint(k4, (B, N), 0, map_hw.shape[0]).astype(jnp.int32)

    out = msda3d_forward_pallas(params, in_feats, sample_priors, sample_feats,
                                map_hw, map_offs, map_ids,
                                num_heads=num_heads, rad_pts=rad_pts, lvl_pts=lvl_pts)
    out = jax.block_until_ready(out)

    ref = msda3d_forward_ref(params, in_feats, sample_priors, sample_feats,
                             map_hw, map_offs, map_ids,
                             num_heads=num_heads, rad_pts=rad_pts, lvl_pts=lvl_pts)
    ref = jax.block_until_ready(ref)

    assert out.shape == (B, N, out_size)
    assert bool(jnp.all(jnp.isfinite(out)))
    assert bool(jnp.allclose(out, ref, atol=2e-3, rtol=2e-3))
    print("KERNEL_OK")
</pallas_src>

<mosaic_0001>
module attributes {stable_mosaic.version = 11 : i64} {
  func.func @_linear_kernel(%arg0: i32, %arg1: memref<16x32xf32, #tpu.memory_space<vmem>>, %arg2: memref<32x128xf32, #tpu.memory_space<vmem>>, %arg3: memref<1x128xf32, #tpu.memory_space<vmem>>, %arg4: memref<16x128xf32, #tpu.memory_space<vmem>>) attributes {dimension_semantics = [#tpu.dimension_semantics<parallel>], iteration_bounds = array<i64: 1>, scalar_prefetch = 0 : i64, scratch_operands = 0 : i64, tpu.core_type = #tpu.core_type<tc>, window_params = [{transform_indices = @transform_0, window_bounds = array<i64: 16, 32>}, {pipeline_mode = #tpu.pipeline_mode<synchronous>, transform_indices = @transform_1, window_bounds = array<i64: 32, 128>}, {pipeline_mode = #tpu.pipeline_mode<synchronous>, transform_indices = @transform_2, window_bounds = array<i64: 1, 128>}, {transform_indices = @transform_3, window_bounds = array<i64: 16, 128>}]} {
    %c0 = arith.constant 0 : index
    %c0_0 = arith.constant 0 : index
    %0 = vector.load %arg1[%c0, %c0_0] : memref<16x32xf32, #tpu.memory_space<vmem>>, vector<16x32xf32>
    %c0_1 = arith.constant 0 : index
    %c0_2 = arith.constant 0 : index
    %1 = vector.load %arg2[%c0_1, %c0_2] : memref<32x128xf32, #tpu.memory_space<vmem>>, vector<32x128xf32>
    %cst = arith.constant dense<0.000000e+00> : vector<16x128xf32>
    %2 = tpu.matmul %0, %1, %cst {dimension_numbers = #tpu.dot_dimension_numbers<[1], [0], [0], [1], [0, 0, 1, 1], [], []>} : vector<16x32xf32>, vector<32x128xf32>, vector<16x128xf32> -> vector<16x128xf32>
    %c0_3 = arith.constant 0 : index
    %c0_4 = arith.constant 0 : index
    %3 = vector.load %arg3[%c0_3, %c0_4] : memref<1x128xf32, #tpu.memory_space<vmem>>, vector<1x128xf32>
    %4 = vector.broadcast %3 : vector<1x128xf32> to vector<16x128xf32>
    %5 = arith.addf %2, %4 : vector<16x128xf32>
    %c0_5 = arith.constant 0 : index
    %c0_6 = arith.constant 0 : index
    %6 = vector.load %arg4[%c0_5, %c0_6] : memref<16x128xf32, #tpu.memory_space<vmem>>, vector<16x128xf32>
    tpu.vector_store %arg4[%c0_5, %c0_6], %5 {strides = array<i32>} : memref<16x128xf32, #tpu.memory_space<vmem>>, vector<16x128xf32>,
    return
  }
  func.func @transform_0(%arg0: i32) -> (i32, i32) {
    %c0_i32 = arith.constant 0 : i32
    %c0_i32_0 = arith.constant 0 : i32
    return %arg0, %c0_i32 : i32, i32
  }
  func.func @transform_1(%arg0: i32) -> (i32, i32) {
    %c0_i32 = arith.constant 0 : i32
    %c0_i32_0 = arith.constant 0 : i32
    %c0_i32_1 = arith.constant 0 : i32
    return %c0_i32, %c0_i32_0 : i32, i32
  }
  func.func @transform_2(%arg0: i32) -> (i32, i32) {
    %c0_i32 = arith.constant 0 : i32
    %c0_i32_0 = arith.constant 0 : i32
    %c0_i32_1 = arith.constant 0 : i32
    return %c0_i32, %c0_i32_0 : i32, i32
  }
  func.func @transform_3(%arg0: i32) -> (i32, i32) {
    %c0_i32 = arith.constant 0 : i32
    %c0_i32_0 = arith.constant 0 : i32
    return %arg0, %c0_i32 : i32, i32
  }
}

</mosaic_0001>

<llo_original>
// kernel: tpu_custom_call.1
$region0: #{tpu_custom_call.1}
  #allocation0 [shape = 'u32[]', space=smem, size = 0x4, offset = 0x4, fixed_abs, tag = 'smem constant byte address 0x4 - core index']
  #allocation1 [shape = 'u32[144,128]{1,0:T(1,128)}', space=vmem, size = 0x12000, scoped, tag = 'internal scratch']
  %s0 = inlined_call_operand.hbm [shape: f32[16,32], index: 0, kind: input, shape index: {}]
  %s1 = inlined_call_operand.hbm [shape: f32[32,128], index: 1, kind: input, shape index: {}]
  %s2 = inlined_call_operand.vmem [shape: f32[1,128], index: 2, kind: input, shape index: {}]
  %s3 = inlined_call_operand.hbm [shape: f32[16,128], index: 3, kind: output, shape index: {}]
  %s4 = sld [smem:[#allocation0]]
  $region30: #{tpu_custom_call.1} parent=0
    _
  %s6 = ssub.s32 1, %s4
  %s7 = scalar_select 0, %s6, %s4
  $region1: #{tpu_custom_call.1} parent=0
    #allocation2 [shape = 'u8[8192]{0}', space=vmem, size = 0x2000, scoped, tag = 'input window, operand 0, single buffered']
    #allocation3 [shape = 's32[1]{0}', space=sflag, size = 0x4, scoped, tag = 'scoped memory for tpu_custom_call.1']
    #allocation4 [shape = 's32[1]{0}', space=sflag, size = 0x4, scoped, tag = 'scoped memory for tpu_custom_call.1']
    #allocation5 [shape = 'u8[16384]{0}', space=vmem, size = 0x4000, scoped, tag = 'input window, operand 1, single buffered']
    #allocation6 [shape = 's32[1]{0}', space=sflag, size = 0x4, scoped, tag = 'scoped memory for tpu_custom_call.1']
    #allocation7 [shape = 'u8[8192]{0}', space=vmem, size = 0x2000, scoped, tag = 'output window, operand 0, single buffered']
    %8 = vsyncpa [#allocation3], 0
    %9 = vsyncpa [#allocation6], 0
    %10 = vsyncpa [#allocation4], 0
    // Predicated region
    $region2: #{tpu_custom_call.1} parent=1 // pred_check
      _
    $region3: #{tpu_custom_call.1} parent=1 // pred_check_branch
      %12 = sbr.rel (0) target = $region5
    $region4: #{tpu_custom_call.1} parent=1 // pred_region
      %s14 = ssub.s32 256, 256
      %15 = vsyncadd [#allocation3], %s14
      %s16 = sshll.u32 [#allocation2], 4
      %s17 = int_to_ptr.vmem [resolvable:$true] %s16
      %22 = dma.hbm_to_vmem [thread:$0]  %s0, 256, %s17, [#allocation3], 128, 128, 8
    $region5: #{tpu_custom_call.1} parent=1 // pred_fallthru
      _
    // Predicated region
    $region6: #{tpu_custom_call.1} parent=1 // pred_check
      _
    $region7: #{tpu_custom_call.1} parent=1 // pred_check_branch
      %24 = sbr.rel (0) target = $region9
    $region8: #{tpu_custom_call.1} parent=1 // pred_region
      %s26 = ssub.s32 512, 512
      %27 = vsyncadd [#allocation6], %s26
      %s28 = sshll.u32 [#allocation5], 4
      %s29 = int_to_ptr.vmem [resolvable:$true] %s28
      %34 = dma.hbm_to_vmem [thread:$0]  %s1, 512, %s29, [#allocation6], 128, 128, 8
    $region9: #{tpu_custom_call.1} parent=1 // pred_fallthru
      _
    // Predicated region
    $region10: #{tpu_custom_call.1} parent=1 // pred_check
      _
    $region11: #{tpu_custom_call.1} parent=1 // pred_check_branch
      %36 = sbr.rel (0) target = $region13
    $region12: #{tpu_custom_call.1} parent=1 // pred_region
      _
    $region13: #{tpu_custom_call.1} parent=1 // pred_fallthru
      _
    // Predicated region
    $region14: #{tpu_custom_call.1} parent=1 // pred_check
      _
    $region15: #{tpu_custom_call.1} parent=1 // pred_check_branch
      %38 = sbr.rel (0) target = $region17
    $region16: #{tpu_custom_call.1} parent=1 // pred_region
      %39 = dma.done [#allocation3], 256
    $region17: #{tpu_custom_call.1} parent=1 // pred_fallthru
      _
    // Predicated region
    $region18: #{tpu_custom_call.1} parent=1 // pred_check
      _
    $region19: #{tpu_custom_call.1} parent=1 // pred_check_branch
      %41 = sbr.rel (0) target = $region21
    $region20: #{tpu_custom_call.1} parent=1 // pred_region
      %42 = dma.done [#allocation6], 512
    $region21: #{tpu_custom_call.1} parent=1 // pred_fallthru
      _
    %v43 = vld [vmem:[#allocation2] sm:$0xff]
    %v44 = vld [vmem:[#allocation2 + $0x8] sm:$0xff]
    %v45 = vld [vmem:[#allocation5] sm:$0xff]
    %v46 = vld [vmem:[#allocation5 + $0x8] sm:$0xff]
    %v47 = vld [vmem:[#allocation5 + $0x10] sm:$0xff]
    %v48 = vld [vmem:[#allocation5 + $0x18] sm:$0xff]
    %v49 = vld [vmem:[%s2] sm:$0x1]
    %v51 = vlaneseq
    %v52 = vshrl.u32 %v51, 7
    %v53 = vsub.s32 0, %v52
    %v54 = vrot.slane %v49, %v53
    %vm56 = vcmask 261120
    %v58 = vsel %vm56, %v43, 0
    %v61 = vsel %vm56, %v44, 0
    %63 = vmatprep.subr.mxu0 0.0
    %64 = vmatpush1.msra.mxu0 %v45
    %65 = vmatprep.subr.mxu0 0.0
    %66 = vmatpush1.msra.mxu0 %v46
    %67 = vmatprep.subr.mxu0 0.0
    %68 = vmatpush1.msra.mxu0 %v47
    %69 = vmatprep.subr.mxu0 0.0
    %70 = vmatpush1.msra.mxu0 %v48
    %71 = vmatprep.subr.mxu0 0.0
    %72 = vmatpush1.msra.mxu0 0.0
    %73 = vmatprep.subr.mxu0 0.0
    %74 = vmatpush1.msra.mxu0 0.0
    %75 = vmatprep.subr.mxu0 0.0
    %76 = vmatpush1.msra.mxu0 0.0
    %77 = vmatprep.subr.mxu0 0.0
    %78 = vmatpush1.msra.mxu0 0.0
    %79 = vmatprep.subr.mxu0 0.0
    %80 = vmatpush1.msra.mxu0 0.0
    %81 = vmatprep.subr.mxu0 0.0
    %82 = vmatpush1.msra.mxu0 0.0
    %83 = vmatprep.subr.mxu0 0.0
    %84 = vmatpush1.msra.mxu0 0.0
    %85 = vmatprep.subr.mxu0 0.0
    %86 = vmatpush1.msra.mxu0 0.0
    %87 = vmatprep.subr.mxu0 0.0
    %88 = vmatpush1.msra.mxu0 0.0
    %89 = vmatprep.subr.mxu0 0.0
    %90 = vmatpush1.msra.mxu0 0.0
    %91 = vmatprep.subr.mxu0 0.0
    %92 = vmatpush1.msra.mxu0 0.0
    %93 = vmatprep.subr.mxu0 0.0
    %94 = vmatpush1.msra.mxu0 0.0
    %95 = vmatprep.subr.mxu0 0.0
    %96 = vmatpush1.msra.mxu0 0.0
    %97 = vmatprep.subr.mxu0 0.0
    %98 = vmatpush1.msra.mxu0 0.0
    %99 = vmatprep.subr.mxu0 0.0
    %100 = vmatpush1.msra.mxu0 0.0
    %101 = vmatprep.subr.mxu0 0.0
    %102 = vmatpush1.msra.mxu0 0.0
    %103 = vmatprep.subr.mxu0 0.0
    %104 = vmatpush1.msra.mxu0 0.0
    %105 = vmatprep.subr.mxu0 0.0
    %106 = vmatpush1.msra.mxu0 0.0
    %107 = vmatprep.subr.mxu0 0.0
    %108 = vmatpush1.msra.mxu0 0.0
    %109 = vmatprep.subr.mxu0 0.0
    %110 = vmatpush1.msra.mxu0 0.0
    %111 = vmatprep.subr.mxu0 0.0
    %112 = vmatpush1.msra.mxu0 0.0
    %113 = vmatprep.subr.mxu0 0.0
    %114 = vmatpush1.msra.mxu0 0.0
    %115 = vmatprep.subr.mxu0 0.0
    %116 = vmatpush1.msra.mxu0 0.0
    %117 = vmatprep.subr.mxu0 0.0
    %118 = vmatpush1.msra.mxu0 0.0
    %119 = vmatprep.subr.mxu0 0.0
    %120 = vmatpush1.msra.mxu0 0.0
    %121 = vmatprep.subr.mxu0 0.0
    %122 = vmatpush1.msra.mxu0 0.0
    %123 = vmatprep.subr.mxu0 0.0
    %124 = vmatpush1.msra.mxu0 0.0
    %125 = vmatprep.subr.mxu0 0.0
    %126 = vmatpush1.msra.mxu0 0.0
    %127 = vmatprep.mubr.f32.mxu0 0.0
    %128 = vmatmul.mubr.f32.gmra.mrb[0].mxu0 %v58
    %v129 = vpop.f32.mrb[0].mxu0
    %v130 = vadd.f32 %v54, %v129
    %v131 = vpop.f32.mrb[0].mxu0
    %132 = vmatprep.mubr.f32.mxu0 0.0
    %133 = vmatmul.mubr.f32.gmra.mrb[0].mxu0 %v61
    %v134 = vpop.f32.mrb[0].mxu0
    %v135 = vadd.f32 %v54, %v134
    %v136 = vpop.f32.mrb[0].mxu0
    %137 = vdwg.mxu0
    %138 = vst [vmem:[#allocation7] sm:$0xff] %v130
    %139 = vst [vmem:[#allocation7 + $0x8] sm:$0xff] %v135
    // Predicated region
    $region22: #{tpu_custom_call.1} parent=1 // pred_check
      _
    $region23: #{tpu_custom_call.1} parent=1 // pred_check_branch
      %141 = sbr.rel (0) target = $region25
    $region24: #{tpu_custom_call.1} parent=1 // pred_region
      %s143 = ssub.s32 256, 256
      %144 = vsyncadd [#allocation4], %s143
      %s145 = sshll.u32 [#allocation7], 4
      %s146 = int_to_ptr.vmem [resolvable:$true] %s145
      %151 = dma.vmem_to_hbm [thread:$0]  %s146, 256, %s3, [#allocation4], 128, 128, 8
    $region25: #{tpu_custom_call.1} parent=1 // pred_fallthru
      _
    // Predicated region
    $region26: #{tpu_custom_call.1} parent=1 // pred_check
      _
    $region27: #{tpu_custom_call.1} parent=1 // pred_check_branch
      %153 = sbr.rel (0) target = $region29
    $region28: #{tpu_custom_call.1} parent=1 // pred_region
      %154 = dma.done [#allocation4], 256
    $region29: #{tpu_custom_call.1} parent=1 // pred_fallthru
      _
    %155 = vsyncpa [#allocation3], 1
    %156 = vsyncpa [#allocation6], 1
    %157 = vsyncpa [#allocation4], 1

</llo_original>
